<compile_context>
chip_gen: v5e
topology: v5e:2x2
jax: 0.10.0
libtpu: 0.0.40
codegen_flags: <defaults>
</compile_context>

<pallas_src>
import functools

import numpy as np
import jax
import jax.numpy as jnp
from jax.experimental import pallas as pl
from jax.experimental.pallas import tpu as pltpu

# ---------------- configuration (small shapes consistent with the module) ----
B, T = 2, 3
H = W = 8
C = 4                        # number of "graph" channels (len(mask))
RDIM = 32
FDIM = 8
HW = H * W
BHW = B * HW                 # 128 -> full sublane / MXU-M fill
BC = B * C                   # 8
NUM_GRU_LAYERS = 2
_HIGHEST = jax.lax.Precision.HIGHEST


# ---------------- static tap tables for the 3x3 zero-padded "same" conv ------
# tap k = kh*3 + kw (kh-major, kw-minor), offsets dh = kh-1, dw = kw-1.
# In the batch-flattened (B*HW) row layout the per-tap shift is a cyclic roll;
# every row whose source pixel crosses an image / batch boundary (or wraps)
# is exactly a row that the spatial validity mask zeroes out.
def _tap_tables(hh, ww, bb):
    hw = hh * ww
    n = bb * hw
    p = np.arange(n)
    y = (p % hw) // ww
    x = p % ww
    shifts, masks = [], []
    for dh in (-1, 0, 1):                 # torch kernel row  i = dh + 1
        for dw in (-1, 0, 1):             # torch kernel col  j = dw + 1
            off = dh * ww + dw
            shifts.append(int((-off) % n))        # jnp.roll convention
            ok = (y + dh >= 0) & (y + dh < hh) & (x + dw >= 0) & (x + dw < ww)
            masks.append(ok.astype(np.float32))
    return tuple(shifts), np.stack(masks)[:, :, None]     # (9,), (9, BHW, 1)


TAP_SHIFTS_JNP, _TAP_MASKS_NP = _tap_tables(H, W, B)


def _probe_pltpu_roll_sign():
    """One-time on-device check of pltpu.roll's shift convention so the conv
    tap table can never silently pick up a mirrored shift."""
    x = jnp.arange(BHW * FDIM, dtype=jnp.float32).reshape(BHW, FDIM)

    def kernel(x_ref, o_ref):
        o_ref[...] = pltpu.roll(x_ref[...], 3, axis=0)

    y = pl.pallas_call(
        kernel, out_shape=jax.ShapeDtypeStruct((BHW, FDIM), jnp.float32))(x)
    if jnp.array_equal(y, jnp.roll(x, 3, axis=0)):
        return 1
    if jnp.array_equal(y, jnp.roll(x, -3, axis=0)):
        return -1
    raise RuntimeError("pltpu.roll semantics differ from jnp.roll in an "
                       "unexpected way; cannot build the conv tap table.")


def _hw_tap_shifts(sign):
    if sign > 0:
        return TAP_SHIFTS_JNP
    return tuple(int((-s) % BHW) for s in TAP_SHIFTS_JNP)


def _im2col_w(wt):
    """torch conv weight (Cout, Cin, 3, 3) -> per-tap matmul layout (9, Cin, Cout)."""
    co, ci = wt.shape[0], wt.shape[1]
    return jnp.transpose(wt, (2, 3, 1, 0)).reshape(9, ci, co)


# ---------------- fused kernel: full T-step RefConv + 2-layer GRU ------------
def _fused_refgru(oo_bd, ofc1, refs0, cmask, tmask64, tmask32,
                  wconv, bconv, wgru, bgru, tap_shifts_hw):
    tt = oo_bd.shape[0]
    r = RDIM

    def kernel(oo_ref, ofc1_ref, refs0_ref, cmask_ref, tmask64_ref, tmask32_ref,
               wconv_ref, bconv_ref, wgru_ref, bgru_ref,
               outs_ref, hids_ref, refs_bd_sc):
        # Block-diagonal refs scratch; off-diagonal blocks stay zero forever.
        refs_bd_sc[...] = jnp.zeros_like(refs_bd_sc)

        def set_refs_bd(refs):
            refs_bd_sc[0:BC, 0:r] = refs
            refs_bd_sc[BC:2 * BC, r:2 * r] = refs

        def conv3x3(x, row_lo, row_hi, tmask_ref, acc):
            # 3x3 "same" conv as 9 accumulated matmuls (no im2col lane concat).
            # The per-tap shift is a cyclic sublane roll; boundary rows are
            # zeroed by the pre-broadcast tap mask.
            for k in range(9):
                s = tap_shifts_hw[k]
                xk = pltpu.roll(x, s, axis=0) if s else x
                xk = xk * tmask_ref[k]
                acc = acc + jnp.dot(xk, wconv_ref[k, row_lo:row_hi, :],
                                    preferred_element_type=jnp.float32)
            return acc

        def gru_cell(x, h, wi, wh, bi, bh):
            # torch.nn.GRU cell, gate order [r | z | n], b_hn inside the r* term.
            gi = jnp.dot(x, wi, preferred_element_type=jnp.float32) + bi
            gh = jnp.dot(h, wh, preferred_element_type=jnp.float32) + bh
            rg = jax.nn.sigmoid(gi[:, :r] + gh[:, :r])
            zg = jax.nn.sigmoid(gi[:, r:2 * r] + gh[:, r:2 * r])
            ng = jnp.tanh(gi[:, 2 * r:] + rg * gh[:, 2 * r:])
            return (1.0 - zg) * ng + zg * h

        # Constants loaded once, hoisted out of the T loop.
        wi0, wh0, wi1, wh1 = wgru_ref[0], wgru_ref[1], wgru_ref[2], wgru_ref[3]
        bi0, bh0, bi1, bh1 = bgru_ref[0], bgru_ref[1], bgru_ref[2], bgru_ref[3]
        b2, b3 = bconv_ref[0], bconv_ref[1]
        cmask = cmask_ref[...]

        # reset_state (hids=None path)
        refs = refs0_ref[...]                                 # (BC, R)
        set_refs_bd(refs)
        h0 = jnp.zeros((BC, r), jnp.float32)
        h1 = jnp.zeros((BC, r), jnp.float32)

        for t in range(tt):                 # T=3: fully unrolled recurrence
            oo = oo_ref[t]                                    # (BHW, 2*BC)

            # RefConv: fea = [o @ refs | o2 @ refs] in one MXU op via the
            # block-diagonal refs.
            fea = jnp.dot(oo, refs_bd_sc[...],
                          preferred_element_type=jnp.float32)  # (BHW, 2R)

            # conv1 (+ReLU); other_fea branch and b1 were hoisted to wrapper.
            a = jnp.maximum(conv3x3(fea, 0, 2 * r, tmask64_ref, ofc1_ref[t]), 0.0)
            # conv2 (+ReLU), conv3
            a = jnp.maximum(conv3x3(a, 2 * r, 3 * r, tmask32_ref, b2), 0.0)
            out_fea = conv3x3(a, 3 * r, 4 * r, tmask32_ref, b3)  # (BHW, R)

            # out = o^T@out_fea / clamp(sum_HW o, 1) + same for o2, per batch:
            # scale block-diagonal columns (exact reciprocal), one transposed
            # contraction, then fold o / o2 halves with a sublane-8 add.
            den = jnp.maximum(jnp.sum(oo, axis=0, keepdims=True), 1.0)  # (1,2BC)
            oon = oo * (1.0 / den)
            mm = jax.lax.dot_general(
                oon, out_fea, (((0,), (0,)), ((), ())),
                preferred_element_type=jnp.float32)           # (2BC, R)
            m = mm[0:BC, :] + mm[BC:2 * BC, :]                 # (BC, R)

            # 2-layer GRU step (fused [r|z|n] gate matmuls).
            h0 = gru_cell(m, h0, wi0, wh0, bi0, bh0)
            h1 = gru_cell(h0, h1, wi1, wh1, bi1, bh1)

            # masked blend + state update
            refs = h1 * cmask + refs * (1.0 - cmask)
            set_refs_bd(refs)
            outs_ref[t] = refs

        hids_ref[0] = h0
        hids_ref[1] = h1

    vmem = lambda: pl.BlockSpec(memory_space=pltpu.MemorySpace.VMEM)
    return pl.pallas_call(
        kernel,
        out_shape=(jax.ShapeDtypeStruct((tt, BC, r), jnp.float32),
                   jax.ShapeDtypeStruct((NUM_GRU_LAYERS, BC, r), jnp.float32)),
        in_specs=[vmem() for _ in range(10)],
        out_specs=(vmem(), vmem()),
        scratch_shapes=[pltpu.VMEM((2 * BC, 2 * r), jnp.float32)],
    )(oo_bd, ofc1, refs0, cmask, tmask64, tmask32, wconv, bconv, wgru, bgru)


# ---------------- full RefGRU forward (hids=None path) -----------------------
@functools.partial(jax.jit, static_argnames=("tap_shifts_hw",))
def ref_gru_forward(params, o, o2, other_fea, *, tap_shifts_hw):
    bb, tt = o.shape[:2]
    cc = o.shape[-1]
    r = RDIM
    assert (bb, cc) == (B, C)          # static layout tables assume these

    # ---- reset_state ----
    mask_col = params['mask'][:, None]                                   # (C,1)
    refs0 = (params['initial_all_state'] * (1.0 - mask_col)
             + params['initial_state'][None, :] * mask_col)              # (C,R)
    refs0 = jnp.broadcast_to(refs0[None], (bb, cc, r)).reshape(bb * cc, r)
    cmask = jnp.broadcast_to(jnp.tile(mask_col, (bb, 1)), (bb * cc, r))  # (BC,R)

    # ---- layout plumbing: merged block-diagonal [o | o2], (T, BHW, 2*BC) ----
    o_seq = o.reshape(bb, tt, HW, cc).transpose(1, 0, 2, 3)              # (T,B,HW,C)
    o2_seq = o2.reshape(bb, tt, HW, cc).transpose(1, 0, 2, 3)
    eye = jnp.eye(bb, dtype=jnp.float32)
    bd = lambda x: (x[:, :, :, None, :] * eye[None, :, None, :, None]
                    ).reshape(tt, bb * HW, bb * cc)
    oo_bd = jnp.concatenate([bd(o_seq), bd(o2_seq)], axis=-1)            # (T,128,16)

    tap_masks = jnp.asarray(_TAP_MASKS_NP)                               # (9,BHW,1)

    # ---- hoisted other_fea branch of conv1 (+ its bias b1) -------------------
    w1k = _im2col_w(params['conv1_w'])                                   # (9,72,32)
    w1_oo, w1_of = w1k[:, :2 * r, :], w1k[:, 2 * r:, :]
    of_full = jnp.broadcast_to(
        other_fea.transpose(1, 0, 2)[:, :, None, :],
        (tt, bb, HW, FDIM)).reshape(tt, bb * HW, FDIM)
    ofc1 = (jnp.zeros((tt, bb * HW, r), jnp.float32)
            + params['conv1_b'][None, None, :])
    for k in range(9):
        xk = jnp.roll(of_full, TAP_SHIFTS_JNP[k], axis=1) * tap_masks[k]
        ofc1 = ofc1 + jnp.einsum('tpf,fr->tpr', xk, w1_of[k],
                                 precision=_HIGHEST)

    # ---- packed, pre-broadcast constants (10 operands total) -----------------
    tmask64 = jnp.broadcast_to(tap_masks, (9, bb * HW, 2 * r))
    tmask32 = jnp.broadcast_to(tap_masks, (9, bb * HW, r))
    wconv = jnp.concatenate([w1_oo, _im2col_w(params['conv2_w']),
                             _im2col_w(params['conv3_w'])], axis=1)      # (9,128,32)
    bconv = jnp.stack([params['conv2_b'][None, :],
                       params['conv3_b'][None, :]])                      # (2,1,32)
    wgru = jnp.stack([params['gru_wih0'].T, params['gru_whh0'].T,
                      params['gru_wih1'].T, params['gru_whh1'].T])       # (4,32,96)
    bgru = jnp.stack([params['gru_bih0'][None, :], params['gru_bhh0'][None, :],
                      params['gru_bih1'][None, :], params['gru_bhh1'][None, :]])

    outs_flat, hids = _fused_refgru(oo_bd, ofc1, refs0, cmask, tmask64, tmask32,
                                    wconv, bconv, wgru, bgru, tap_shifts_hw)

    outs = outs_flat.reshape(tt, bb, cc, r).transpose(1, 0, 2, 3)        # (B,T,C,R)

    # pack_hids
    refs_final = outs[:, -1].reshape(bb, cc * r)
    hids_packed = hids.reshape(NUM_GRU_LAYERS, bb, cc, r).transpose(
        1, 0, 2, 3).reshape(bb, NUM_GRU_LAYERS * cc * r)
    return outs, jnp.concatenate([refs_final, hids_packed], axis=-1)


# ---------------- deterministic parameter init (torch layouts) ---------------
def init_params(key):
    ks = jax.random.split(key, 16)

    def rnd(k, shape, scale=0.1):
        return jax.random.normal(k, shape, jnp.float32) * scale

    cin1 = 2 * RDIM + FDIM
    p = {}
    p['conv1_w'] = rnd(ks[0], (RDIM, cin1, 3, 3))
    p['conv1_b'] = rnd(ks[1], (RDIM,))
    p['conv2_w'] = rnd(ks[2], (RDIM, RDIM, 3, 3))
    p['conv2_b'] = rnd(ks[3], (RDIM,))
    p['conv3_w'] = rnd(ks[4], (RDIM, RDIM, 3, 3))
    p['conv3_b'] = rnd(ks[5], (RDIM,))
    for l in range(NUM_GRU_LAYERS):
        p[f'gru_wih{l}'] = rnd(ks[6 + 4 * l], (3 * RDIM, RDIM))
        p[f'gru_whh{l}'] = rnd(ks[7 + 4 * l], (3 * RDIM, RDIM))
        p[f'gru_bih{l}'] = rnd(ks[8 + 4 * l], (3 * RDIM,))
        p[f'gru_bhh{l}'] = rnd(ks[9 + 4 * l], (3 * RDIM,))
    p['initial_state'] = jax.random.normal(ks[14], (RDIM,), jnp.float32)
    p['initial_all_state'] = jax.random.normal(ks[15], (C, RDIM), jnp.float32)
    p['mask'] = jnp.array([1.0, 0.0, 1.0, 1.0], jnp.float32)
    return p


# ---------------- pure-JAX reference (straight port of the PyTorch module) ---
@jax.jit
def ref_gru_forward_reference(params, o, o2, other_fea):
    bb, tt = o.shape[:2]
    cc = o.shape[-1]
    r = RDIM

    def conv3x3(x, w, b):          # x (B,H,W,Cin); torch weight (Cout,Cin,3,3)
        xp = jnp.pad(x, ((0, 0), (1, 1), (1, 1), (0, 0)))
        out = jnp.zeros(x.shape[:3] + (w.shape[0],), jnp.float32) + b
        for i in range(3):
            for j in range(3):
                out = out + jnp.einsum('bhwc,oc->bhwo',
                                       xp[:, i:i + H, j:j + W, :], w[:, :, i, j],
                                       precision=_HIGHEST)
        return out

    mask_col = params['mask'][:, None]
    refs = (params['initial_all_state'] * (1.0 - mask_col)
            + params['initial_state'][None, :] * mask_col)
    refs = jnp.broadcast_to(refs[None], (bb, cc, r))
    h = jnp.zeros((NUM_GRU_LAYERS, bb * cc, r), jnp.float32)

    outs = []
    for t in range(tt):
        o_t = o[:, t].reshape(bb, HW, cc)
        o2_t = o2[:, t].reshape(bb, HW, cc)
        fea_o = jnp.einsum('bpc,bcr->bpr', o_t, refs,
                           precision=_HIGHEST).reshape(bb, H, W, r)
        fea_o2 = jnp.einsum('bpc,bcr->bpr', o2_t, refs,
                            precision=_HIGHEST).reshape(bb, H, W, r)
        of = jnp.broadcast_to(other_fea[:, t][:, None, None, :], (bb, H, W, FDIM))
        all_fea = jnp.concatenate([fea_o, fea_o2, of], axis=-1)
        a = jax.nn.relu(conv3x3(all_fea, params['conv1_w'], params['conv1_b']))
        a = jax.nn.relu(conv3x3(a, params['conv2_w'], params['conv2_b']))
        out_fea = conv3x3(a, params['conv3_w'], params['conv3_b']).reshape(bb, HW, r)
        oT = jnp.swapaxes(o_t, 1, 2)
        o2T = jnp.swapaxes(o2_t, 1, 2)
        m = (jnp.einsum('bcp,bpr->bcr', oT, out_fea, precision=_HIGHEST)
             / jnp.maximum(jnp.sum(oT, -1, keepdims=True), 1.0)
             + jnp.einsum('bcp,bpr->bcr', o2T, out_fea, precision=_HIGHEST)
             / jnp.maximum(jnp.sum(o2T, -1, keepdims=True), 1.0))
        x = m.reshape(bb * cc, r)
        new_h = []
        for l in range(NUM_GRU_LAYERS):
            gi = jnp.dot(x, params[f'gru_wih{l}'].T,
                         precision=_HIGHEST) + params[f'gru_bih{l}']
            gh = jnp.dot(h[l], params[f'gru_whh{l}'].T,
                         precision=_HIGHEST) + params[f'gru_bhh{l}']
            rg = jax.nn.sigmoid(gi[:, :r] + gh[:, :r])
            zg = jax.nn.sigmoid(gi[:, r:2 * r] + gh[:, r:2 * r])
            ng = jnp.tanh(gi[:, 2 * r:] + rg * gh[:, 2 * r:])
            x = (1.0 - zg) * ng + zg * h[l]
            new_h.append(x)
        h = jnp.stack(new_h)
        refs = x.reshape(bb, cc, r) * mask_col + refs * (1.0 - mask_col)
        outs.append(refs)
    outs = jnp.stack(outs, axis=1)
    refs_flat = refs.reshape(bb, cc * r)
    hids_packed = jnp.transpose(h.reshape(NUM_GRU_LAYERS, bb, cc, r),
                                (1, 0, 2, 3)).reshape(bb, -1)
    return outs, jnp.concatenate([refs_flat, hids_packed], axis=-1)


if __name__ == "__main__":
    key = jax.random.PRNGKey(0)
    kp, ko, ko2, kf = jax.random.split(key, 4)
    params = init_params(kp)

    o = jax.random.uniform(ko, (B, T, H, W, C), jnp.float32)
    o2 = jax.random.uniform(ko2, (B, T, H, W, C), jnp.float32)
    other_fea = jax.random.normal(kf, (B, T, FDIM), jnp.float32) * 0.1

    # one-time roll-convention probe -> static tap-shift table for the kernel
    tap_shifts_hw = _hw_tap_shifts(_probe_pltpu_roll_sign())

    outs, packed = ref_gru_forward(params, o, o2, other_fea,
                                   tap_shifts_hw=tap_shifts_hw)
    outs, packed = jax.block_until_ready((outs, packed))

    assert outs.shape == (B, T, C, RDIM)
    assert packed.shape == (B, (1 + NUM_GRU_LAYERS) * C * RDIM)
    assert bool(jnp.all(jnp.isfinite(outs))) and bool(jnp.all(jnp.isfinite(packed)))

    # Numerical check against the pure-JAX padded-conv reference.  Tolerance is
    # loose enough to absorb MXU f32-pass accumulation differences, but a
    # structural error (mirrored conv taps, gate order, normalization) would
    # produce O(0.3-1) deviations and fail clearly.
    outs_r, packed_r = jax.block_until_ready(
        ref_gru_forward_reference(params, o, o2, other_fea))
    np.testing.assert_allclose(np.asarray(outs), np.asarray(outs_r),
                               rtol=5e-2, atol=5e-2)
    np.testing.assert_allclose(np.asarray(packed), np.asarray(packed_r),
                               rtol=5e-2, atol=5e-2)

    print("KERNEL_OK")
</pallas_src>

<mosaic_0001>
module attributes {stable_mosaic.version = 11 : i64} {
  func.func @kernel(%arg0: memref<128x8xf32, #tpu.memory_space<vmem>>, %arg1: memref<128x8xf32, #tpu.memory_space<vmem>>) attributes {dimension_semantics = [], scalar_prefetch = 0 : i64, scratch_operands = 0 : i64, tpu.core_type = #tpu.core_type<tc>} {
    %c0 = arith.constant 0 : index
    %c0_0 = arith.constant 0 : index
    %0 = vector.load %arg0[%c0, %c0_0] : memref<128x8xf32, #tpu.memory_space<vmem>>, vector<128x8xf32>
    %c3_i32 = arith.constant 3 : i32
    %1 = tpu.dynamic_rotate %0 by %c3_i32 dim 0 : vector<128x8xf32>, i32 -> vector<128x8xf32>
    %c0_1 = arith.constant 0 : index
    %c0_2 = arith.constant 0 : index
    %2 = vector.load %arg1[%c0_1, %c0_2] : memref<128x8xf32, #tpu.memory_space<vmem>>, vector<128x8xf32>
    tpu.vector_store %arg1[%c0_1, %c0_2], %1 {strides = array<i32>} : memref<128x8xf32, #tpu.memory_space<vmem>>, vector<128x8xf32>,
    return
  }
}

</mosaic_0001>

<llo_original>
// kernel: tpu_custom_call.1
$region0: #{tpu_custom_call.1}
  #allocation0 [shape = 'u32[]', space=smem, size = 0x4, offset = 0x4, fixed_abs, tag = 'smem constant byte address 0x4 - core index']
  #allocation1 [shape = 'u32[72,128]{1,0:T(1,128)}', space=vmem, size = 0x9000, scoped, tag = 'internal scratch']
  %s0 = inlined_call_operand.vmem [shape: f32[128,8], index: 0, kind: input, shape index: {}]
  %s1 = inlined_call_operand.vmem [shape: f32[128,8], index: 1, kind: output, shape index: {}]
  %s2 = sld [smem:[#allocation0]]
  $region14: #{tpu_custom_call.1} parent=0
    _
  %s4 = ssub.s32 1, %s2
  %s5 = scalar_select 0, %s4, %s2
  // Predicated region
  $region2: #{tpu_custom_call.1} parent=0 // pred_check
    _
  $region3: #{tpu_custom_call.1} parent=0 // pred_check_branch
    %7 = sbr.rel (0) target = $region5
  $region4: #{tpu_custom_call.1} parent=0 // pred_region
    _
  $region5: #{tpu_custom_call.1} parent=0 // pred_fallthru
    _
  %v8 = vld [vmem:[%s0] sm:$0xff]
  %v9 = vld [vmem:[%s0 + $0x8] sm:$0xff]
  %v10 = vld [vmem:[%s0 + $0x10] sm:$0xff]
  %v11 = vld [vmem:[%s0 + $0x18] sm:$0xff]
  %v12 = vld [vmem:[%s0 + $0x20] sm:$0xff]
  %v13 = vld [vmem:[%s0 + $0x28] sm:$0xff]
  %v14 = vld [vmem:[%s0 + $0x30] sm:$0xff]
  %v15 = vld [vmem:[%s0 + $0x38] sm:$0xff]
  %v16 = vld [vmem:[%s0 + $0x40] sm:$0xff]
  %v17 = vld [vmem:[%s0 + $0x48] sm:$0xff]
  %v18 = vld [vmem:[%s0 + $0x50] sm:$0xff]
  %v19 = vld [vmem:[%s0 + $0x58] sm:$0xff]
  %v20 = vld [vmem:[%s0 + $0x60] sm:$0xff]
  %v21 = vld [vmem:[%s0 + $0x68] sm:$0xff]
  %v22 = vld [vmem:[%s0 + $0x70] sm:$0xff]
  %v23 = vld [vmem:[%s0 + $0x78] sm:$0xff]
  %v24 = vrot.slane %v8, 5
  %v25 = vrot.slane %v9, 5
  %v26 = vrot.slane %v10, 5
  %v27 = vrot.slane %v11, 5
  %v28 = vrot.slane %v12, 5
  %v29 = vrot.slane %v13, 5
  %v30 = vrot.slane %v14, 5
  %v31 = vrot.slane %v15, 5
  %v32 = vrot.slane %v16, 5
  %v33 = vrot.slane %v17, 5
  %v34 = vrot.slane %v18, 5
  %v35 = vrot.slane %v19, 5
  %v36 = vrot.slane %v20, 5
  %v37 = vrot.slane %v21, 5
  %v38 = vrot.slane %v22, 5
  %v39 = vrot.slane %v23, 5
  %v40 = vlaneseq
  %v41 = vshrl.u32 %v40, 7
  %vm42 = vcmp.lt.s32.totalorder %v41, 3
  %v43 = vsel %vm42, %v38, %v39
  %v44 = vsel %vm42, %v37, %v38
  %v45 = vsel %vm42, %v36, %v37
  %v46 = vsel %vm42, %v35, %v36
  %v47 = vsel %vm42, %v34, %v35
  %v48 = vsel %vm42, %v33, %v34
  %v49 = vsel %vm42, %v32, %v33
  %v50 = vsel %vm42, %v31, %v32
  %v51 = vsel %vm42, %v30, %v31
  %v52 = vsel %vm42, %v29, %v30
  %v53 = vsel %vm42, %v28, %v29
  %v54 = vsel %vm42, %v27, %v28
  %v55 = vsel %vm42, %v26, %v27
  %v56 = vsel %vm42, %v25, %v26
  %v57 = vsel %vm42, %v24, %v25
  %v58 = vsel %vm42, %v39, %v24
  %vm59 = vcmask 64512
  %60 = vst.msk [vmem:[%s1] sm:$0xff] %vm59, %v58
  %61 = vst.msk [vmem:[%s1 + $0x8] sm:$0xff] %vm59, %v57
  %62 = vst.msk [vmem:[%s1 + $0x10] sm:$0xff] %vm59, %v56
  %63 = vst.msk [vmem:[%s1 + $0x18] sm:$0xff] %vm59, %v55
  %64 = vst.msk [vmem:[%s1 + $0x20] sm:$0xff] %vm59, %v54
  %65 = vst.msk [vmem:[%s1 + $0x28] sm:$0xff] %vm59, %v53
  %66 = vst.msk [vmem:[%s1 + $0x30] sm:$0xff] %vm59, %v52
  %67 = vst.msk [vmem:[%s1 + $0x38] sm:$0xff] %vm59, %v51
  %68 = vst.msk [vmem:[%s1 + $0x40] sm:$0xff] %vm59, %v50
  %69 = vst.msk [vmem:[%s1 + $0x48] sm:$0xff] %vm59, %v49
  %70 = vst.msk [vmem:[%s1 + $0x50] sm:$0xff] %vm59, %v48
  %71 = vst.msk [vmem:[%s1 + $0x58] sm:$0xff] %vm59, %v47
  %72 = vst.msk [vmem:[%s1 + $0x60] sm:$0xff] %vm59, %v46
  %73 = vst.msk [vmem:[%s1 + $0x68] sm:$0xff] %vm59, %v45
  %74 = vst.msk [vmem:[%s1 + $0x70] sm:$0xff] %vm59, %v44
  %75 = vst.msk [vmem:[%s1 + $0x78] sm:$0xff] %vm59, %v43
  // Predicated region
  $region6: #{tpu_custom_call.1} parent=0 // pred_check
    _
  $region7: #{tpu_custom_call.1} parent=0 // pred_check_branch
    %77 = sbr.rel (0) target = $region9
  $region8: #{tpu_custom_call.1} parent=0 // pred_region
    _
  $region9: #{tpu_custom_call.1} parent=0 // pred_fallthru
    _
  // Predicated region
  $region10: #{tpu_custom_call.1} parent=0 // pred_check
    _
  $region11: #{tpu_custom_call.1} parent=0 // pred_check_branch
    %79 = sbr.rel (0) target = $region13
  $region12: #{tpu_custom_call.1} parent=0 // pred_region
    _
  $region13: #{tpu_custom_call.1} parent=0 // pred_fallthru
    _

</llo_original>
